<compile_context>
chip_gen: v5e
topology: v5e:2x2
jax: 0.10.0
libtpu: 0.0.40
codegen_flags: <defaults>
</compile_context>

<pallas_src>
import functools
import math

import jax
import jax.numpy as jnp
from jax.experimental import pallas as pl
from jax.experimental.pallas import tpu as pltpu

EPS = 1e-5      # nn.BatchNorm2d default eps
LANES = 128     # lane-dense padded width for all FC outputs


# ------------------------------------------------------------------ fused kernel
def _attention_kernel(x_ref, fcw_ref, bnb_ref, hw_ref, hb_ref, o_ref, *,
                      k_start, kernel_num):
    # x_ref: (TB, Cin, H*W) bf16 -- NCHW with flattened (lane-dense) spatial axis.
    # AdaptiveAvgPool2d(1) + fc + BN-scale: the 1/(H*W) and BN scale are pre-folded into
    # fcw, so the kernel only does a spatial SUM here (f32 accumulate).
    pooled = jnp.sum(x_ref[...].astype(jnp.float32), axis=-1)               # (TB, Cin)

    # fc (1x1 conv, no bias, scale folded) + BN bias + ReLU.
    att = jnp.dot(pooled.astype(jnp.bfloat16), fcw_ref[...],
                  preferred_element_type=jnp.float32)                       # (TB, 128)
    att = jnp.maximum(att + bnb_ref[...], 0.0)

    # All four head FCs fused into one lane-dense matmul (1/T folded into hw/hb):
    # columns [0:Cin) channel_fc | [Cin:Cin+Cout) filter_fc |
    # [..:..+k*k) spatial_fc | [k_start:k_start+kernel_num) kernel_fc | rest = padding.
    zt = jnp.dot(att.astype(jnp.bfloat16), hw_ref[...],
                 preferred_element_type=jnp.float32) + hb_ref[...]          # (TB, 128)

    # sigmoid(x / T) for channel / filter / spatial columns.
    sig = jax.nn.sigmoid(zt)

    # masked softmax(x / T) over the kernel_num columns only.
    lane = jax.lax.broadcasted_iota(jnp.int32, zt.shape, 1)
    kmask = (lane >= k_start) & (lane < k_start + kernel_num)
    zk = jnp.where(kmask, zt, -1e30)
    zk = zk - jnp.max(zk, axis=-1, keepdims=True)
    ek = jnp.where(kmask, jnp.exp(zk), 0.0)
    sm = ek * pl.reciprocal(jnp.sum(ek, axis=-1, keepdims=True), approx=True)

    # INVARIANT: padding lanes (>= total_n) hold sigmoid values (~0.5) and are never
    # zeroed here; the wrapper must only slice lanes < total_n.
    o_ref[...] = jnp.where(kmask, sm, sig)


# ------------------------------------------------------------------ wrapper
def _choose_batch_tile(batch, max_tb=256):
    """Batch tile: full batch when small; otherwise a multiple of 8 dividing B."""
    if batch <= max_tb:
        return batch
    for tb in range(max_tb, 7, -8):          # 256, 248, ..., 8 (all multiples of 8)
        if batch % tb == 0:
            return tb
    return batch                              # fallback: one block covering everything


def attention_forward(params, x_nchw, *, in_planes, out_planes, kernel_size,
                      kernel_num):
    B, C, H, W = x_nchw.shape
    assert C == in_planes
    # Keep x bf16 at the kernel boundary: halves the only non-trivial HBM->VMEM copy.
    x = x_nchw.reshape(B, C, H * W).astype(jnp.bfloat16)

    kk = kernel_size * kernel_size
    k_start = in_planes + out_planes + kk
    total_n = k_start + kernel_num
    assert total_n <= LANES

    tb = _choose_batch_tile(B)
    grid = (B // tb,)

    kern = functools.partial(_attention_kernel, k_start=k_start, kernel_num=kernel_num)
    out = pl.pallas_call(
        kern,
        out_shape=jax.ShapeDtypeStruct((B, LANES), jnp.float32),
        grid_spec=pltpu.PrefetchScalarGridSpec(
            num_scalar_prefetch=0,
            grid=grid,
            in_specs=[
                pl.BlockSpec((tb, C, H * W), lambda i: (i, 0, 0)),       # x (batch-tiled)
                pl.BlockSpec((in_planes, LANES), lambda i: (0, 0)),      # fc_w (resident)
                pl.BlockSpec((1, LANES), lambda i: (0, 0)),              # bn_b
                pl.BlockSpec((LANES, LANES), lambda i: (0, 0)),          # head_w
                pl.BlockSpec((1, LANES), lambda i: (0, 0)),              # head_b
            ],
            out_specs=pl.BlockSpec((tb, LANES), lambda i: (i, 0)),
        ),
        compiler_params=pltpu.CompilerParams(
            dimension_semantics=("parallel",)),   # shards batch across TCs on v7x
    )(x, params["fc_w"], params["bn_b"], params["head_w"], params["head_b"])

    # Split the lane-dense slab into the four PyTorch-shaped outputs (cheap XLA glue).
    # Only lanes < total_n are sliced (padding lanes are never read).
    channel_att = out[:, :in_planes].reshape(B, in_planes, 1, 1)
    filter_att = out[:, in_planes:in_planes + out_planes].reshape(B, out_planes, 1, 1)
    spatial_att = out[:, in_planes + out_planes:k_start].reshape(
        B, 1, 1, 1, kernel_size, kernel_size)
    kernel_att = out[:, k_start:k_start + kernel_num].reshape(
        B, kernel_num, 1, 1, 1, 1)
    return channel_att, filter_att, spatial_att, kernel_att


# ------------------------------------------------------------------ parameters
def init_params(key, *, in_planes, out_planes, kernel_size, kernel_num,
                spatial_size, temperature, reduction=0.0625, min_channel=16):
    attention_channel = max(int(in_planes * reduction), min_channel)
    keys = jax.random.split(key, 5)

    def kaiming(k, fan_out, shape):
        # kaiming_normal_(mode='fan_out', nonlinearity='relu') for 1x1 convs.
        return jax.random.normal(k, shape, jnp.float32) * math.sqrt(2.0 / fan_out)

    # fc: Conv2d(in_planes, attention_channel, 1, bias=False) as (Cin, A), padded to 128
    # lanes.  Fold the AdaptiveAvgPool2d(1) divide (1/(H*W)) and the BN inference scale
    # (gamma=1, mean=0, var=1 -> 1/sqrt(1+eps)) into the weight, so the kernel does a
    # plain spatial sum followed by one matmul and one bias-add before the ReLU.
    fc_w = kaiming(keys[0], attention_channel, (in_planes, attention_channel))
    bn_scale = 1.0 / math.sqrt(1.0 + EPS)
    fc_w = fc_w * (bn_scale / float(spatial_size))
    fc_w_pad = jnp.zeros((in_planes, LANES), jnp.float32).at[:, :attention_channel].set(fc_w)

    # BatchNorm2d bias (beta=0 at init) -- kept as the only pre-ReLU bias add.
    bn_b = jnp.zeros((1, LANES), jnp.float32)

    # channel_fc / filter_fc / spatial_fc / kernel_fc concatenated along N, padded to
    # (128, 128).  1/temperature is folded into the weights and biases.
    kk = kernel_size * kernel_size
    ch_w = kaiming(keys[1], in_planes, (attention_channel, in_planes))
    fl_w = kaiming(keys[2], out_planes, (attention_channel, out_planes))
    sp_w = kaiming(keys[3], kk, (attention_channel, kk))
    kn_w = kaiming(keys[4], kernel_num, (attention_channel, kernel_num))
    head = jnp.concatenate([ch_w, fl_w, sp_w, kn_w], axis=1) * (1.0 / float(temperature))
    total_n = head.shape[1]
    head_w = jnp.zeros((LANES, LANES), jnp.float32).at[:attention_channel, :total_n].set(head)
    head_b = jnp.zeros((1, LANES), jnp.float32)   # conv biases init to 0 (then * 1/T = 0)

    return {
        "fc_w": fc_w_pad.astype(jnp.bfloat16),    # bf16 at MXU inputs, f32 accumulation
        "bn_b": bn_b,
        "head_w": head_w.astype(jnp.bfloat16),
        "head_b": head_b,
    }


# ------------------------------------------------------------------ pure-JAX reference
def _reference_forward(params, x_nchw, *, in_planes, out_planes, kernel_size, kernel_num):
    B, C, H, W = x_nchw.shape
    x = x_nchw.reshape(B, C, H * W).astype(jnp.bfloat16).astype(jnp.float32)
    pooled = jnp.sum(x, axis=-1).astype(jnp.bfloat16).astype(jnp.float32)
    att = jnp.maximum(pooled @ params["fc_w"].astype(jnp.float32) + params["bn_b"], 0.0)
    att = att.astype(jnp.bfloat16).astype(jnp.float32)
    zt = att @ params["head_w"].astype(jnp.float32) + params["head_b"]
    sig = jax.nn.sigmoid(zt)
    kk = kernel_size * kernel_size
    k_start = in_planes + out_planes + kk
    ca = sig[:, :in_planes].reshape(B, in_planes, 1, 1)
    fa = sig[:, in_planes:in_planes + out_planes].reshape(B, out_planes, 1, 1)
    sa = sig[:, in_planes + out_planes:k_start].reshape(B, 1, 1, 1, kernel_size, kernel_size)
    ka = jax.nn.softmax(zt[:, k_start:k_start + kernel_num], axis=-1).reshape(
        B, kernel_num, 1, 1, 1, 1)
    return ca, fa, sa, ka


# ------------------------------------------------------------------ main
if __name__ == "__main__":
    IN_PLANES, OUT_PLANES, KSIZE, KNUM = 32, 64, 3, 4
    TEMP = 50.0   # module-level `temperature` in tiny_bayesian.py
    B, H, W = 2, 16, 16

    key = jax.random.PRNGKey(0)
    pkey, xkey = jax.random.split(key)
    params = init_params(pkey, in_planes=IN_PLANES, out_planes=OUT_PLANES,
                         kernel_size=KSIZE, kernel_num=KNUM,
                         spatial_size=H * W, temperature=TEMP)
    x = jax.random.normal(xkey, (B, IN_PLANES, H, W), jnp.float32)   # PyTorch-style NCHW

    fwd = jax.jit(functools.partial(attention_forward, in_planes=IN_PLANES,
                                    out_planes=OUT_PLANES, kernel_size=KSIZE,
                                    kernel_num=KNUM))
    ca, fa, sa, ka = jax.block_until_ready(fwd(params, x))

    # Shape / dtype / range sanity (matches the PyTorch module's output structure).
    assert ca.shape == (B, IN_PLANES, 1, 1) and ca.dtype == jnp.float32
    assert fa.shape == (B, OUT_PLANES, 1, 1)
    assert sa.shape == (B, 1, 1, 1, KSIZE, KSIZE)
    assert ka.shape == (B, KNUM, 1, 1, 1, 1)
    assert bool(jnp.all((ca > 0) & (ca < 1))) and bool(jnp.all((fa > 0) & (fa < 1)))
    assert abs(float(jnp.sum(ka)) - float(B)) < 5e-3   # softmax rows sum to 1

    # Numerical check against a pure-JAX reference of the same (folded, bf16) parameters.
    ca_r, fa_r, sa_r, ka_r = _reference_forward(
        params, x, in_planes=IN_PLANES, out_planes=OUT_PLANES,
        kernel_size=KSIZE, kernel_num=KNUM)
    for got, ref in ((ca, ca_r), (fa, fa_r), (sa, sa_r), (ka, ka_r)):
        assert float(jnp.max(jnp.abs(got - ref))) < 2e-3

    print("KERNEL_OK")
</pallas_src>

<mosaic_0001>
module attributes {stable_mosaic.version = 11 : i64} {
  func.func @_attention_kernel(%arg0: i32, %arg1: memref<2x32x256xbf16, #tpu.memory_space<vmem>>, %arg2: memref<32x128xbf16, #tpu.memory_space<vmem>>, %arg3: memref<1x128xf32, #tpu.memory_space<vmem>>, %arg4: memref<128x128xbf16, #tpu.memory_space<vmem>>, %arg5: memref<1x128xf32, #tpu.memory_space<vmem>>, %arg6: memref<2x128xf32, #tpu.memory_space<vmem>>) attributes {dimension_semantics = [#tpu.dimension_semantics<parallel>], iteration_bounds = array<i64: 1>, scalar_prefetch = 0 : i64, scratch_operands = 0 : i64, tpu.core_type = #tpu.core_type<tc>, window_params = [{transform_indices = @transform_0, window_bounds = array<i64: 2, 32, 256>}, {pipeline_mode = #tpu.pipeline_mode<synchronous>, transform_indices = @transform_1, window_bounds = array<i64: 32, 128>}, {pipeline_mode = #tpu.pipeline_mode<synchronous>, transform_indices = @transform_2, window_bounds = array<i64: 1, 128>}, {pipeline_mode = #tpu.pipeline_mode<synchronous>, transform_indices = @transform_3, window_bounds = array<i64: 128, 128>}, {pipeline_mode = #tpu.pipeline_mode<synchronous>, transform_indices = @transform_4, window_bounds = array<i64: 1, 128>}, {transform_indices = @transform_5, window_bounds = array<i64: 2, 128>}]} {
    %c0 = arith.constant 0 : index
    %c0_0 = arith.constant 0 : index
    %c0_1 = arith.constant 0 : index
    %0 = vector.load %arg1[%c0, %c0_0, %c0_1] : memref<2x32x256xbf16, #tpu.memory_space<vmem>>, vector<2x32x256xbf16>
    %1 = arith.extf %0 : vector<2x32x256xbf16> to vector<2x32x256xf32>
    %cst = arith.constant dense<0.000000e+00> : vector<2x32xf32>
    %2 = vector.multi_reduction <add>, %1, %cst [2] : vector<2x32x256xf32> to vector<2x32xf32>
    %3 = arith.truncf %2 : vector<2x32xf32> to vector<2x32xbf16>
    %c0_2 = arith.constant 0 : index
    %c0_3 = arith.constant 0 : index
    %4 = vector.load %arg2[%c0_2, %c0_3] : memref<32x128xbf16, #tpu.memory_space<vmem>>, vector<32x128xbf16>
    %cst_4 = arith.constant dense<0.000000e+00> : vector<2x128xf32>
    %5 = tpu.matmul %3, %4, %cst_4 {dimension_numbers = #tpu.dot_dimension_numbers<[1], [0], [0], [1], [0, 0, 1, 1], [], []>} : vector<2x32xbf16>, vector<32x128xbf16>, vector<2x128xf32> -> vector<2x128xf32>
    %c0_5 = arith.constant 0 : index
    %c0_6 = arith.constant 0 : index
    %6 = vector.load %arg3[%c0_5, %c0_6] : memref<1x128xf32, #tpu.memory_space<vmem>>, vector<1x128xf32>
    %7 = vector.broadcast %6 : vector<1x128xf32> to vector<2x128xf32>
    %8 = arith.addf %5, %7 : vector<2x128xf32>
    %cst_7 = arith.constant 0.000000e+00 : f32
    %9 = vector.broadcast %cst_7 : f32 to vector<2x128xf32>
    %10 = arith.maximumf %8, %9 : vector<2x128xf32>
    %11 = arith.truncf %10 : vector<2x128xf32> to vector<2x128xbf16>
    %c0_8 = arith.constant 0 : index
    %c0_9 = arith.constant 0 : index
    %12 = vector.load %arg4[%c0_8, %c0_9] : memref<128x128xbf16, #tpu.memory_space<vmem>>, vector<128x128xbf16>
    %cst_10 = arith.constant dense<0.000000e+00> : vector<2x128xf32>
    %13 = tpu.matmul %11, %12, %cst_10 {dimension_numbers = #tpu.dot_dimension_numbers<[1], [0], [0], [1], [0, 0, 1, 1], [], []>} : vector<2x128xbf16>, vector<128x128xbf16>, vector<2x128xf32> -> vector<2x128xf32>
    %c0_11 = arith.constant 0 : index
    %c0_12 = arith.constant 0 : index
    %14 = vector.load %arg5[%c0_11, %c0_12] : memref<1x128xf32, #tpu.memory_space<vmem>>, vector<1x128xf32>
    %15 = vector.broadcast %14 : vector<1x128xf32> to vector<2x128xf32>
    %16 = arith.addf %13, %15 : vector<2x128xf32>
    %17 = arith.negf %16 : vector<2x128xf32>
    %18 = math.exp %17 : vector<2x128xf32>
    %cst_13 = arith.constant 1.000000e+00 : f32
    %19 = vector.broadcast %cst_13 : f32 to vector<2x128xf32>
    %20 = arith.addf %19, %18 : vector<2x128xf32>
    %21 = arith.divf %19, %20 : vector<2x128xf32>
    %22 = tpu.iota {dimensions = array<i32: 1>} : vector<2x128xi32>
    %c105_i32 = arith.constant 105 : i32
    %23 = vector.broadcast %c105_i32 : i32 to vector<2x128xi32>
    %24 = arith.cmpi sge, %22, %23 : vector<2x128xi32>
    %c109_i32 = arith.constant 109 : i32
    %25 = vector.broadcast %c109_i32 : i32 to vector<2x128xi32>
    %26 = arith.cmpi slt, %22, %25 : vector<2x128xi32>
    %27 = arith.andi %24, %26 : vector<2x128xi1>
    %cst_14 = arith.constant -1.000000e+30 : f32
    %28 = vector.broadcast %cst_14 : f32 to vector<2x128xf32>
    %29 = arith.select %27, %16, %28 : vector<2x128xi1>, vector<2x128xf32>
    %cst_15 = arith.constant dense<0xFF800000> : vector<2xf32>
    %30 = vector.multi_reduction <maximumf>, %29, %cst_15 [1] : vector<2x128xf32> to vector<2xf32>
    %31 = vector.shape_cast %30 : vector<2xf32> to vector<2x1xf32>
    %32 = vector.broadcast %31 : vector<2x1xf32> to vector<2x128xf32>
    %33 = arith.subf %29, %32 : vector<2x128xf32>
    %34 = math.exp %33 : vector<2x128xf32>
    %cst_16 = arith.constant 0.000000e+00 : f32
    %35 = vector.broadcast %cst_16 : f32 to vector<2x128xf32>
    %36 = arith.select %27, %34, %35 : vector<2x128xi1>, vector<2x128xf32>
    %cst_17 = arith.constant dense<0.000000e+00> : vector<2xf32>
    %37 = vector.multi_reduction <add>, %36, %cst_17 [1] : vector<2x128xf32> to vector<2xf32>
    %38 = vector.shape_cast %37 : vector<2xf32> to vector<2x1xf32>
    %39 = tpu.reciprocal %38 {approx = true} : vector<2x1xf32> -> vector<2x1xf32>
    %40 = vector.broadcast %39 : vector<2x1xf32> to vector<2x128xf32>
    %41 = arith.mulf %36, %40 : vector<2x128xf32>
    %42 = arith.select %27, %41, %21 : vector<2x128xi1>, vector<2x128xf32>
    %c0_18 = arith.constant 0 : index
    %c0_19 = arith.constant 0 : index
    %43 = vector.load %arg6[%c0_18, %c0_19] : memref<2x128xf32, #tpu.memory_space<vmem>>, vector<2x128xf32>
    tpu.vector_store %arg6[%c0_18, %c0_19], %42 {strides = array<i32>} : memref<2x128xf32, #tpu.memory_space<vmem>>, vector<2x128xf32>,
    return
  }
  func.func @transform_0(%arg0: i32) -> (i32, i32, i32) {
    %c0_i32 = arith.constant 0 : i32
    %c0_i32_0 = arith.constant 0 : i32
    %c0_i32_1 = arith.constant 0 : i32
    return %arg0, %c0_i32, %c0_i32_0 : i32, i32, i32
  }
  func.func @transform_1(%arg0: i32) -> (i32, i32) {
    %c0_i32 = arith.constant 0 : i32
    %c0_i32_0 = arith.constant 0 : i32
    %c0_i32_1 = arith.constant 0 : i32
    return %c0_i32, %c0_i32_0 : i32, i32
  }
  func.func @transform_2(%arg0: i32) -> (i32, i32) {
    %c0_i32 = arith.constant 0 : i32
    %c0_i32_0 = arith.constant 0 : i32
    %c0_i32_1 = arith.constant 0 : i32
    return %c0_i32, %c0_i32_0 : i32, i32
  }
  func.func @transform_3(%arg0: i32) -> (i32, i32) {
    %c0_i32 = arith.constant 0 : i32
    %c0_i32_0 = arith.constant 0 : i32
    %c0_i32_1 = arith.constant 0 : i32
    return %c0_i32, %c0_i32_0 : i32, i32
  }
  func.func @transform_4(%arg0: i32) -> (i32, i32) {
    %c0_i32 = arith.constant 0 : i32
    %c0_i32_0 = arith.constant 0 : i32
    %c0_i32_1 = arith.constant 0 : i32
    return %c0_i32, %c0_i32_0 : i32, i32
  }
  func.func @transform_5(%arg0: i32) -> (i32, i32) {
    %c0_i32 = arith.constant 0 : i32
    %c0_i32_0 = arith.constant 0 : i32
    return %arg0, %c0_i32 : i32, i32
  }
}

</mosaic_0001>

<llo_original>
// kernel: attention_forward.1
$region0: #{attention_forward.1}
  #allocation0 [shape = 'u32[]', space=smem, size = 0x4, offset = 0x4, fixed_abs, tag = 'smem constant byte address 0x4 - core index']
  #allocation1 [shape = 'u32[72,128]{1,0:T(1,128)}', space=vmem, size = 0x9000, scoped, tag = 'internal scratch']
  %s0 = inlined_call_operand.vmem [shape: bf16[2,32,256], index: 0, kind: input, shape index: {}]
  %s1 = inlined_call_operand.vmem [shape: bf16[32,128], index: 1, kind: input, shape index: {}]
  %s2 = inlined_call_operand.vmem [shape: f32[1,128], index: 2, kind: input, shape index: {}]
  %s3 = inlined_call_operand.vmem [shape: bf16[128,128], index: 3, kind: input, shape index: {}]
  %s4 = inlined_call_operand.vmem [shape: f32[1,128], index: 4, kind: input, shape index: {}]
  %s5 = inlined_call_operand.vmem [shape: f32[2,128], index: 5, kind: output, shape index: {}]
  %s6 = sld [smem:[#allocation0]]
  $region30: #{attention_forward.1} parent=0
    _
  %s8 = ssub.s32 1, %s6
  %s9 = scalar_select 0, %s8, %s6
  // Predicated region
  $region2: #{attention_forward.1} parent=0 // pred_check
    _
  $region3: #{attention_forward.1} parent=0 // pred_check_branch
    %11 = sbr.rel (0) target = $region5
  $region4: #{attention_forward.1} parent=0 // pred_region
    _
  $region5: #{attention_forward.1} parent=0 // pred_fallthru
    _
  // Predicated region
  $region6: #{attention_forward.1} parent=0 // pred_check
    _
  $region7: #{attention_forward.1} parent=0 // pred_check_branch
    %13 = sbr.rel (0) target = $region9
  $region8: #{attention_forward.1} parent=0 // pred_region
    _
  $region9: #{attention_forward.1} parent=0 // pred_fallthru
    _
  // Predicated region
  $region10: #{attention_forward.1} parent=0 // pred_check
    _
  $region11: #{attention_forward.1} parent=0 // pred_check_branch
    %15 = sbr.rel (0) target = $region13
  $region12: #{attention_forward.1} parent=0 // pred_region
    _
  $region13: #{attention_forward.1} parent=0 // pred_fallthru
    _
  // Predicated region
  $region14: #{attention_forward.1} parent=0 // pred_check
    _
  $region15: #{attention_forward.1} parent=0 // pred_check_branch
    %17 = sbr.rel (0) target = $region17
  $region16: #{attention_forward.1} parent=0 // pred_region
    _
  $region17: #{attention_forward.1} parent=0 // pred_fallthru
    _
  // Predicated region
  $region18: #{attention_forward.1} parent=0 // pred_check
    _
  $region19: #{attention_forward.1} parent=0 // pred_check_branch
    %19 = sbr.rel (0) target = $region21
  $region20: #{attention_forward.1} parent=0 // pred_region
    _
  $region21: #{attention_forward.1} parent=0 // pred_fallthru
    _
  %v21 = vld [vmem:[%s0] sm:$0xff]
  %v22 = vld [vmem:[%s0 + $0x8] sm:$0xff]
  %v23 = vld [vmem:[%s0 + $0x10] sm:$0xff]
  %v24 = vld [vmem:[%s0 + $0x18] sm:$0xff]
  %v25 = vld [vmem:[%s0 + $0x20] sm:$0xff]
  %v26 = vld [vmem:[%s0 + $0x28] sm:$0xff]
  %v27 = vld [vmem:[%s0 + $0x30] sm:$0xff]
  %v28 = vld [vmem:[%s0 + $0x38] sm:$0xff]
  %v29 = vunpack.c.l.bf16 %v21
  %v30 = vunpack.c.h.bf16 %v21
  %v31 = vunpack.c.l.bf16 %v22
  %v32 = vunpack.c.h.bf16 %v22
  %v33 = vunpack.c.l.bf16 %v23
  %v34 = vunpack.c.h.bf16 %v23
  %v35 = vunpack.c.l.bf16 %v24
  %v36 = vunpack.c.h.bf16 %v24
  %v37 = vunpack.c.l.bf16 %v25
  %v38 = vunpack.c.h.bf16 %v25
  %v39 = vunpack.c.l.bf16 %v26
  %v40 = vunpack.c.h.bf16 %v26
  %v41 = vunpack.c.l.bf16 %v27
  %v42 = vunpack.c.h.bf16 %v27
  %v43 = vunpack.c.l.bf16 %v28
  %v44 = vunpack.c.h.bf16 %v28
  %v45 = vadd.f32 %v29, %v30
  %46 = vadd.xlane.f32.xlu0 %v45
  %v47 = vpop.xlane.xlu0 %46
  %v48 = vadd.f32 %v31, %v32
  %49 = vadd.xlane.f32.xlu0 %v48
  %v50 = vpop.xlane.xlu0 %49
  %v51 = vadd.f32 %v33, %v34
  %52 = vadd.xlane.f32.xlu0 %v51
  %v53 = vpop.xlane.xlu0 %52
  %v54 = vadd.f32 %v35, %v36
  %55 = vadd.xlane.f32.xlu0 %v54
  %v56 = vpop.xlane.xlu0 %55
  %v57 = vadd.f32 %v37, %v38
  %58 = vadd.xlane.f32.xlu0 %v57
  %v59 = vpop.xlane.xlu0 %58
  %v60 = vadd.f32 %v39, %v40
  %61 = vadd.xlane.f32.xlu0 %v60
  %v62 = vpop.xlane.xlu0 %61
  %v63 = vadd.f32 %v41, %v42
  %64 = vadd.xlane.f32.xlu0 %v63
  %v65 = vpop.xlane.xlu0 %64
  %v66 = vadd.f32 %v43, %v44
  %67 = vadd.xlane.f32.xlu0 %v66
  %v68 = vpop.xlane.xlu0 %67
  %v69 = vpack.c.bf16 %v50, %v47
  %v70 = vpack.c.bf16 %v56, %v53
  %v71 = vpack.c.bf16 %v62, %v59
  %v72 = vpack.c.bf16 %v68, %v65
  %v73 = vld [vmem:[%s1] sm:$0xf]
  %v74 = vld [vmem:[%s1 + $0x4] sm:$0xf]
  %v75 = vld [vmem:[%s1 + $0x8] sm:$0xf]
  %v76 = vld [vmem:[%s1 + $0xc] sm:$0xf]
  %v77 = vld [vmem:[%s2] sm:$0x1]
  %v79 = vperm.slane %v77, 0
  %v85 = vunpack.c.l.b16 %v69
  %v86 = vunpack.c.h.b16 %v69
  %v87 = vunpack.c.l.b16 %v70
  %v88 = vunpack.c.h.b16 %v70
  %v89 = vunpack.c.l.b16 %v71
  %v90 = vunpack.c.h.b16 %v71
  %v91 = vunpack.c.l.b16 %v72
  %v92 = vunpack.c.h.b16 %v72
  %v93 = vlaneseq
  %v94 = vand.u32 %v93, 127
  %v95 = vperm.slane %v85, %v94
  %v96 = vadd.s32 %v94, 4294967288
  %v97 = vperm.slane %v86, %v96
  %vm98 = vcmask 130112
  %v99 = vsel %vm98, %v97, %v95
  %v100 = vadd.s32 %v94, 4294967280
  %v101 = vperm.slane %v87, %v100
  %vm102 = vcmask 195712
  %v103 = vsel %vm102, %v101, %v99
  %v104 = vadd.s32 %v94, 4294967272
  %v105 = vperm.slane %v88, %v104
  %vm106 = vcmask 261312
  %v107 = vsel %vm106, %v105, %v103
  %v108 = vperm.slane %v89, %v94
  %v109 = vperm.slane %v90, %v96
  %v110 = vsel %vm98, %v109, %v108
  %v111 = vperm.slane %v91, %v100
  %v112 = vsel %vm102, %v111, %v110
  %v113 = vperm.slane %v92, %v104
  %v114 = vsel %vm106, %v113, %v112
  %vm115 = vcmask 1041409
  %v116 = vsel %vm115, %v114, %v107
  %v117 = vpack.c.b16 %v116, %v116
  %v122 = vunpack.c.l.b16 %v73
  %v123 = vunpack.c.l.b16 %v74
  %v124 = vunpack.c.l.b16 %v75
  %v125 = vunpack.c.l.b16 %v76
  %v126 = vpack.c.b16 %v123, %v122
  %v127 = vpack.c.b16 %v125, %v124
  %vm130 = vcmask 261120
  %v132 = vsel %vm130, %v117, 0
  %134 = vmatpush.bf16.msra.mxu0 0
  %135 = vmatpush.bf16.msra.mxu0 0
  %136 = vmatpush.bf16.msra.mxu0 0
  %137 = vmatpush.bf16.msra.mxu0 0
  %138 = vmatpush.bf16.msra.mxu0 0
  %139 = vmatpush.bf16.msra.mxu0 0
  %140 = vmatpush.bf16.msra.mxu0 %v127
  %141 = vmatpush.bf16.msra.mxu0 %v126
  %142 = vmatmul.bf16.gmra.mxu0 %v132
  %v143 = vpop.f32.mrf.mxu0
  %v144 = vadd.f32 %v79, %v143
  %v145 = vpop.f32.mrf.mxu0
  %146 = vdwg.mxu0
  %v147 = vmax.f32 %v144, 0.0
  %v148 = vpack.c.bf16 %v147, %v147
  %v149 = vld [vmem:[%s3] sm:$0xf]
  %v150 = vld [vmem:[%s3 + $0x4] sm:$0xf]
  %v151 = vld [vmem:[%s3 + $0x8] sm:$0xf]
  %v152 = vld [vmem:[%s3 + $0xc] sm:$0xf]
  %v153 = vld [vmem:[%s3 + $0x10] sm:$0xf]
  %v154 = vld [vmem:[%s3 + $0x14] sm:$0xf]
  %v155 = vld [vmem:[%s3 + $0x18] sm:$0xf]
  %v156 = vld [vmem:[%s3 + $0x1c] sm:$0xf]
  %v157 = vld [vmem:[%s3 + $0x20] sm:$0xf]
  %v158 = vld [vmem:[%s3 + $0x24] sm:$0xf]
  %v159 = vld [vmem:[%s3 + $0x28] sm:$0xf]
  %v160 = vld [vmem:[%s3 + $0x2c] sm:$0xf]
  %v161 = vld [vmem:[%s3 + $0x30] sm:$0xf]
  %v162 = vld [vmem:[%s3 + $0x34] sm:$0xf]
  %v163 = vld [vmem:[%s3 + $0x38] sm:$0xf]
  %v164 = vld [vmem:[%s3 + $0x3c] sm:$0xf]
  %v165 = vld [vmem:[%s4] sm:$0x1]
  %v167 = vperm.slane %v165, 0
  %v185 = vunpack.c.l.b16 %v149
  %v186 = vunpack.c.l.b16 %v150
  %v187 = vunpack.c.l.b16 %v151
  %v188 = vunpack.c.l.b16 %v152
  %v189 = vunpack.c.l.b16 %v153
  %v190 = vunpack.c.l.b16 %v154
  %v191 = vunpack.c.l.b16 %v155
  %v192 = vunpack.c.l.b16 %v156
  %v193 = vunpack.c.l.b16 %v157
  %v194 = vunpack.c.l.b16 %v158
  %v195 = vunpack.c.l.b16 %v159
  %v196 = vunpack.c.l.b16 %v160
  %v197 = vunpack.c.l.b16 %v161
  %v198 = vunpack.c.l.b16 %v162
  %v199 = vunpack.c.l.b16 %v163
  %v200 = vunpack.c.l.b16 %v164
  %v201 = vpack.c.b16 %v186, %v185
  %v202 = vpack.c.b16 %v188, %v187
  %v203 = vpack.c.b16 %v190, %v189
  %v204 = vpack.c.b16 %v192, %v191
  %v205 = vpack.c.b16 %v194, %v193
  %v206 = vpack.c.b16 %v196, %v195
  %v207 = vpack.c.b16 %v198, %v197
  %v208 = vpack.c.b16 %v200, %v199
  %217 = vmatpush.bf16.msra.mxu0 %v208
  %218 = vmatpush.bf16.msra.mxu0 %v207
  %219 = vmatpush.bf16.msra.mxu0 %v206
  %220 = vmatpush.bf16.msra.mxu0 %v205
  %221 = vmatpush.bf16.msra.mxu0 %v204
  %222 = vmatpush.bf16.msra.mxu0 %v203
  %223 = vmatpush.bf16.msra.mxu0 %v202
  %224 = vmatpush.bf16.msra.mxu0 %v201
  %225 = vmatmul.bf16.gmra.mxu0 %v148
  %v226 = vpop.f32.mrf.mxu0
  %v227 = vadd.f32 %v167, %v226
  %v228 = vpop.f32.mrf.mxu0
  %229 = vdwg.mxu0
  %v230 = vxor.u32 %v227, 2147483648
  %v231 = vmul.f32 %v230, 1.442695
  %v232 = vpow.pop %v231
  %v233 = vadd.f32 %v232, 1.0
  %v234 = vrcp.pop %v233
  %v235 = vmul.f32 %v233, %v234
  %v236 = vsub.f32 1.0, %v235
  %v237 = vmul.f32 %v234, %v236
  %v238 = vadd.f32 %v234, %v237
  %vm239 = vweird.f32 %v233
  %vm240 = vweird.f32 %v234
  %vm241 = vmor %vm239, %vm240
  %v242 = vsel %vm241, %v234, %v238
  %v243 = vand.u32 2147483647, %v233
  %vm244 = vcmp.eq.f32.partialorder %v243, 8.507059e+37
  %v245 = vand.u32 %v233, 2147483648
  %v246 = vor.u32 1.1754944e-38, %v245
  %v247 = vsel %vm244, %v246, %v242
  %v248 = vmul.f32 1.0, %v247
  %vm249 = vcmp.ge.s32.totalorder %v94, 105
  %vm250 = vcmp.lt.s32.totalorder %v94, 109
  %vm251 = vmand %vm249, %vm250
  %v252 = vsel %vm251, %v227, -1e+30
  %vm253 = vcmask 1041408
  %v254 = vsel %vm253, %v252, -inf
  %255 = vmax.xlane.f32.xlu0 %v254
  %v256 = vpop.xlane.xlu0 %255
  %v257 = vsub.f32 %v252, %v256
  %v258 = vmul.f32 %v257, 1.442695
  %v259 = vpow.pop %v258
  %v260 = vsel %vm251, %v259, 0.0
  %v261 = vsel %vm253, %v260, 0.0
  %262 = vadd.xlane.f32.xlu0 %v261
  %v263 = vpop.xlane.xlu0 %262
  %v264 = vrcp.pop %v263
  %v265 = vmul.f32 %v260, %v264
  %v266 = vsel %vm251, %v265, %v248
  %267 = vst [vmem:[%s5] sm:$0x3] %v266
  // Predicated region
  $region22: #{attention_forward.1} parent=0 // pred_check
    _
  $region23: #{attention_forward.1} parent=0 // pred_check_branch
    %269 = sbr.rel (0) target = $region25
  $region24: #{attention_forward.1} parent=0 // pred_region
    _
  $region25: #{attention_forward.1} parent=0 // pred_fallthru
    _
  // Predicated region
  $region26: #{attention_forward.1} parent=0 // pred_check
    _
  $region27: #{attention_forward.1} parent=0 // pred_check_branch
    %271 = sbr.rel (0) target = $region29
  $region28: #{attention_forward.1} parent=0 // pred_region
    _
  $region29: #{attention_forward.1} parent=0 // pred_fallthru
    _

</llo_original>
